<compile_context>
chip_gen: v5e
topology: v5e:2x2
jax: 0.10.0
libtpu: 0.0.40
codegen_flags: <defaults>
</compile_context>

<pallas_src>
import functools

import jax
import jax.numpy as jnp
from jax.experimental import pallas as pl
from jax.experimental.pallas import tpu as pltpu


def attention_kernel(x_ref, w1_ref, b1_ref, w2_ref, o_ref, *, approx_recip=True):
    """One grid step: TB batch rows.

    x_ref : (TB, S, Hp) f32
    w1_ref: (Hp, Hp)    compute dtype (bf16 default), (in, out) orientation
    b1_ref: (1, Hp)     f32
    w2_ref: (1, Hp)     f32 row vector of the Hp->1 projection
    o_ref : (TB, Hp)
    """
    tb, s, h = x_ref.shape
    x = x_ref[...]                                              # (TB, S, Hp) f32

    # --- Linear(H,H) + Tanh on a big-M (TB*S, Hp) operand; bf16 MXU, f32 accumulation. ---
    xm = x.reshape(tb * s, h)
    hid = jnp.tanh(
        jnp.dot(xm.astype(w1_ref.dtype), w1_ref[...],
                preferred_element_type=jnp.float32)
        + b1_ref[...]                                           # (1, Hp) broadcast, f32
    )                                                           # (TB*S, Hp) f32

    # --- Linear(H,1) as VPU multiply + lane reduction (avoid an N=1 MXU pass). ---
    # b2 omitted on purpose: softmax(s + c) == softmax(s).
    w2_row = w2_ref[...].reshape(1, 1, h)                       # (1, 1, Hp)
    scores = jnp.sum(hid.reshape(tb, s, h) * w2_row,
                     axis=-1, keepdims=True)                    # (TB, S, 1)

    # --- Numerically stable softmax over the sequence axis (dim=1), f32. ---
    m = jnp.max(scores, axis=1, keepdims=True)                  # (TB, 1, 1)
    e = jnp.exp(scores - m)                                     # (TB, S, 1)
    denom = jnp.sum(e, axis=1, keepdims=True)                   # (TB, 1, 1), >= 1
    wts = e * pl.reciprocal(denom, approx=approx_recip)         # EUP vrcp when approx

    # --- Weighted sum over the sequence axis -> lane-dense (TB, Hp) output slab. ---
    o_ref[...] = jnp.sum(wts * x, axis=1).astype(o_ref.dtype)


def _vmem_capacity_bytes():
    try:
        return int(pltpu.get_tpu_info().vmem_capacity_bytes)
    except Exception:
        return 64 << 20             # conservative: v7x physical per-core VMEM


def _derive_tb(B, S, Hp, x_bytes, w_bytes, budget_bytes):
    """Largest batch tile that fits the VMEM budget, sublane-aligned, and (for big
    batches) small enough that the grid has >= 2 steps for the v7x megacore."""
    weight_bytes = Hp * Hp * w_bytes + 4 * Hp * 4             # W1 (single-buffered) + b1/w2
    # Per batch row: x double-buffered (f32) + bf16 cast copy + ~3 f32 intermediates.
    per_row = S * Hp * (2 * x_bytes + w_bytes + 3 * 4) + 2 * Hp * 4
    tb = int(max(1, (budget_bytes - weight_bytes) // per_row))
    if B <= 8:
        return B                                               # full-dim block: always legal
    if tb >= B:
        if B >= 16:
            return max(8, (-(-B // 2)) // 8 * 8)               # >= 2 grid steps, 8-aligned
        return B
    return max(8, (tb // 8) * 8)                               # sublane-aligned tile


def attention_module(x, w1, b1, w2, b2=None, *,
                     compute_dtype=jnp.bfloat16, approx_recip=True):
    """AttentionModule forward.

    x : (B, S, H) float32
    w1: (H, H) in (in, out) orientation (== transposed nn.Linear weight)
    b1: (H,) or (1, H)
    w2: (H, 1), (1, H) or (H,)
    b2: accepted for API parity; not used (softmax shift invariance makes it a no-op).
    compute_dtype: dtype of the first matmul's MXU operands (bf16 default, f32 for parity).
    Returns (B, H) in x.dtype.
    """
    B, S, H = x.shape
    x_bytes = jnp.dtype(x.dtype).itemsize
    w_bytes = jnp.dtype(compute_dtype).itemsize

    # --- Lane-dense H: pad to a multiple of 128 (exact; padded rows/cols are zero). ---
    Hp = max(128, pl.cdiv(H, 128) * 128)
    b1r = b1.reshape(1, H).astype(jnp.float32)
    w2r = w2.reshape(1, H).astype(jnp.float32)
    if Hp != H:
        x = jnp.pad(x, ((0, 0), (0, 0), (0, Hp - H)))
        w1 = jnp.pad(w1, ((0, Hp - H), (0, Hp - H)))
        b1r = jnp.pad(b1r, ((0, 0), (0, Hp - H)))
        w2r = jnp.pad(w2r, ((0, 0), (0, Hp - H)))
    w1c = w1.astype(compute_dtype)                             # (Hp, Hp) MXU operand

    # --- VMEM budget -> batch tile; explicit scoped-VMEM limit with headroom. ---
    vmem_cap = _vmem_capacity_bytes()
    vmem_limit = int(min(0.8 * vmem_cap, 100 * (1 << 20)))
    tb = min(B, _derive_tb(B, S, Hp, x_bytes, w_bytes, int(0.6 * vmem_limit)))

    # Pad batch so B % tb == 0 (padded zero rows give zero outputs, sliced off).
    Bp = pl.cdiv(B, tb) * tb
    if Bp != B:
        x = jnp.pad(x, ((0, Bp - B), (0, 0), (0, 0)))

    cost = pl.CostEstimate(
        flops=int(2 * Bp * S * Hp * Hp + 8 * Bp * S * Hp),
        transcendentals=int(Bp * S * (Hp + 1)),
        bytes_accessed=int(x_bytes * Bp * S * Hp + 4 * Bp * Hp
                           + w_bytes * Hp * Hp + 8 * Hp),
    )

    kernel = functools.partial(attention_kernel, approx_recip=approx_recip)

    def call(use_buffered):
        wkw = {"pipeline_mode": pl.Buffered(1)} if use_buffered else {}
        grid_spec = pltpu.PrefetchScalarGridSpec(
            num_scalar_prefetch=0,
            grid=(Bp // tb,),
            in_specs=[
                pl.BlockSpec((tb, S, Hp), lambda i: (i, 0, 0)),          # x: TB rows/step
                pl.BlockSpec((Hp, Hp), lambda i: (0, 0), **wkw),         # W1 (resident)
                pl.BlockSpec((1, Hp), lambda i: (0, 0), **wkw),          # b1
                pl.BlockSpec((1, Hp), lambda i: (0, 0), **wkw),          # w2 row
            ],
            out_specs=pl.BlockSpec((tb, Hp), lambda i: (i, 0)),          # (TB, Hp) slab
        )
        return pl.pallas_call(
            kernel,
            out_shape=jax.ShapeDtypeStruct((Bp, Hp), x.dtype),
            grid_spec=grid_spec,
            compiler_params=pltpu.CompilerParams(
                dimension_semantics=("parallel",),     # batch axis: megacore/TC-parallel
                vmem_limit_bytes=vmem_limit,
            ),
            cost_estimate=cost,
        )(x, w1c, b1r, w2r)

    try:
        out = call(True)        # single-buffer the constant weight blocks
    except Exception:
        out = call(False)       # fallback if Buffered(1) is rejected by this JAX build

    return out[:B, :H]


def reference(x, w1, b1, w2, b2):
    h = jnp.tanh(x @ w1 + b1.reshape(1, 1, -1))      # (B, S, H)
    scores = h @ w2.reshape(-1, 1) + b2.reshape(())  # (B, S, 1)
    w = jax.nn.softmax(scores, axis=1)               # softmax over seq dim
    return jnp.sum(w * x, axis=1)                    # (B, H)


if __name__ == "__main__":
    B, S, H = 2, 8, 32
    key = jax.random.PRNGKey(0)
    kx, k1, k2, k3, k4 = jax.random.split(key, 5)

    x = jax.random.normal(kx, (B, S, H), dtype=jnp.float32)
    # Deterministic synthetic params, (in, out) orientation == nn.Linear math x @ W^T + b.
    w1 = jax.random.normal(k1, (H, H), dtype=jnp.float32) * 0.1
    b1 = jax.random.normal(k2, (1, H), dtype=jnp.float32) * 0.1
    w2 = jax.random.normal(k3, (H, 1), dtype=jnp.float32) * 0.1
    b2 = jax.random.normal(k4, (1, 1), dtype=jnp.float32) * 0.1

    ref = reference(x, w1, b1, w2, b2)

    # Default fast path: bf16 MXU operands (f32 accumulation), approx softmax reciprocal.
    out = jax.block_until_ready(attention_module(x, w1, b1, w2, b2))
    assert out.shape == (B, H)
    assert bool(jnp.isfinite(out).all())
    assert jnp.allclose(out, ref, atol=5e-2, rtol=5e-2), "bf16 kernel mismatch vs reference"

    # Strict-parity path: f32 MXU operands + exact reciprocal.
    out_f32 = jax.block_until_ready(
        attention_module(x, w1, b1, w2, b2,
                         compute_dtype=jnp.float32, approx_recip=False))
    assert jnp.allclose(out_f32, ref, atol=1e-4, rtol=1e-4), "f32 kernel mismatch vs reference"

    # Exercise H-padding (H % 128 != 0), batch padding, and a multi-step parallel grid.
    B2, S2, H2 = 20, 16, 96
    kx2, k5, k6, k7, k8 = jax.random.split(jax.random.PRNGKey(1), 5)
    x2 = jax.random.normal(kx2, (B2, S2, H2), dtype=jnp.float32)
    w1b = jax.random.normal(k5, (H2, H2), dtype=jnp.float32) * 0.1
    b1b = jax.random.normal(k6, (H2,), dtype=jnp.float32) * 0.1
    w2b = jax.random.normal(k7, (H2,), dtype=jnp.float32) * 0.1
    b2b = jax.random.normal(k8, (1,), dtype=jnp.float32) * 0.1
    ref2 = reference(x2, w1b, b1b, w2b, b2b)
    out2 = jax.block_until_ready(attention_module(x2, w1b, b1b, w2b, b2b))
    assert out2.shape == (B2, H2)
    assert jnp.allclose(out2, ref2, atol=5e-2, rtol=5e-2), "padded-path mismatch vs reference"

    print("KERNEL_OK")
</pallas_src>

<mosaic_0001>
module attributes {stable_mosaic.version = 11 : i64} {
  func.func @attention_kernel(%arg0: i32, %arg1: memref<2x8x128xf32, #tpu.memory_space<vmem>>, %arg2: memref<128x128xbf16, #tpu.memory_space<vmem>>, %arg3: memref<1x128xf32, #tpu.memory_space<vmem>>, %arg4: memref<1x128xf32, #tpu.memory_space<vmem>>, %arg5: memref<2x128xf32, #tpu.memory_space<vmem>>) attributes {dimension_semantics = [#tpu.dimension_semantics<parallel>], iteration_bounds = array<i64: 1>, scalar_prefetch = 0 : i64, scratch_operands = 0 : i64, tpu.core_type = #tpu.core_type<tc>, window_params = [{transform_indices = @transform_0, window_bounds = array<i64: 2, 8, 128>}, {pipeline_mode = #tpu.pipeline_mode<synchronous>, transform_indices = @transform_1, window_bounds = array<i64: 128, 128>}, {pipeline_mode = #tpu.pipeline_mode<synchronous>, transform_indices = @transform_2, window_bounds = array<i64: 1, 128>}, {pipeline_mode = #tpu.pipeline_mode<synchronous>, transform_indices = @transform_3, window_bounds = array<i64: 1, 128>}, {transform_indices = @transform_4, window_bounds = array<i64: 2, 128>}]} {
    %c0 = arith.constant 0 : index
    %c0_0 = arith.constant 0 : index
    %c0_1 = arith.constant 0 : index
    %0 = vector.load %arg1[%c0, %c0_0, %c0_1] : memref<2x8x128xf32, #tpu.memory_space<vmem>>, vector<2x8x128xf32>
    %1 = vector.shape_cast %0 : vector<2x8x128xf32> to vector<16x128xf32>
    %2 = arith.truncf %1 : vector<16x128xf32> to vector<16x128xbf16>
    %c0_2 = arith.constant 0 : index
    %c0_3 = arith.constant 0 : index
    %3 = vector.load %arg2[%c0_2, %c0_3] : memref<128x128xbf16, #tpu.memory_space<vmem>>, vector<128x128xbf16>
    %cst = arith.constant dense<0.000000e+00> : vector<16x128xf32>
    %4 = tpu.matmul %2, %3, %cst {dimension_numbers = #tpu.dot_dimension_numbers<[1], [0], [0], [1], [0, 0, 1, 1], [], []>} : vector<16x128xbf16>, vector<128x128xbf16>, vector<16x128xf32> -> vector<16x128xf32>
    %c0_4 = arith.constant 0 : index
    %c0_5 = arith.constant 0 : index
    %5 = vector.load %arg3[%c0_4, %c0_5] : memref<1x128xf32, #tpu.memory_space<vmem>>, vector<1x128xf32>
    %6 = vector.broadcast %5 : vector<1x128xf32> to vector<16x128xf32>
    %7 = arith.addf %4, %6 : vector<16x128xf32>
    %8 = math.tanh %7 : vector<16x128xf32>
    %c0_6 = arith.constant 0 : index
    %c0_7 = arith.constant 0 : index
    %9 = vector.load %arg4[%c0_6, %c0_7] : memref<1x128xf32, #tpu.memory_space<vmem>>, vector<1x128xf32>
    %10 = vector.shape_cast %9 : vector<1x128xf32> to vector<1x1x128xf32>
    %11 = vector.shape_cast %8 : vector<16x128xf32> to vector<2x8x128xf32>
    %12 = vector.broadcast %10 : vector<1x1x128xf32> to vector<2x8x128xf32>
    %13 = arith.mulf %11, %12 : vector<2x8x128xf32>
    %cst_8 = arith.constant dense<0.000000e+00> : vector<2x8xf32>
    %14 = vector.multi_reduction <add>, %13, %cst_8 [2] : vector<2x8x128xf32> to vector<2x8xf32>
    %15 = vector.shape_cast %14 : vector<2x8xf32> to vector<2x8x1xf32>
    %cst_9 = arith.constant dense<0xFF800000> : vector<2x1xf32>
    %16 = vector.multi_reduction <maximumf>, %15, %cst_9 [1] : vector<2x8x1xf32> to vector<2x1xf32>
    %17 = vector.shape_cast %16 : vector<2x1xf32> to vector<2x1x1xf32>
    %18 = vector.broadcast %17 : vector<2x1x1xf32> to vector<2x8x1xf32>
    %19 = arith.subf %15, %18 : vector<2x8x1xf32>
    %20 = math.exp %19 : vector<2x8x1xf32>
    %cst_10 = arith.constant dense<0.000000e+00> : vector<2x1xf32>
    %21 = vector.multi_reduction <add>, %20, %cst_10 [1] : vector<2x8x1xf32> to vector<2x1xf32>
    %22 = vector.shape_cast %21 : vector<2x1xf32> to vector<2x1x1xf32>
    %23 = tpu.reciprocal %22 {approx = true} : vector<2x1x1xf32> -> vector<2x1x1xf32>
    %24 = vector.broadcast %23 : vector<2x1x1xf32> to vector<2x8x1xf32>
    %25 = arith.mulf %20, %24 : vector<2x8x1xf32>
    %26 = vector.broadcast %25 : vector<2x8x1xf32> to vector<2x8x128xf32>
    %27 = arith.mulf %26, %0 : vector<2x8x128xf32>
    %cst_11 = arith.constant dense<0.000000e+00> : vector<2x128xf32>
    %28 = vector.multi_reduction <add>, %27, %cst_11 [1] : vector<2x8x128xf32> to vector<2x128xf32>
    %c0_12 = arith.constant 0 : index
    %c0_13 = arith.constant 0 : index
    %29 = vector.load %arg5[%c0_12, %c0_13] : memref<2x128xf32, #tpu.memory_space<vmem>>, vector<2x128xf32>
    tpu.vector_store %arg5[%c0_12, %c0_13], %28 {strides = array<i32>} : memref<2x128xf32, #tpu.memory_space<vmem>>, vector<2x128xf32>,
    return
  }
  func.func @transform_0(%arg0: i32) -> (i32, i32, i32) {
    %c0_i32 = arith.constant 0 : i32
    %c0_i32_0 = arith.constant 0 : i32
    %c0_i32_1 = arith.constant 0 : i32
    return %arg0, %c0_i32, %c0_i32_0 : i32, i32, i32
  }
  func.func @transform_1(%arg0: i32) -> (i32, i32) {
    %c0_i32 = arith.constant 0 : i32
    %c0_i32_0 = arith.constant 0 : i32
    %c0_i32_1 = arith.constant 0 : i32
    return %c0_i32, %c0_i32_0 : i32, i32
  }
  func.func @transform_2(%arg0: i32) -> (i32, i32) {
    %c0_i32 = arith.constant 0 : i32
    %c0_i32_0 = arith.constant 0 : i32
    %c0_i32_1 = arith.constant 0 : i32
    return %c0_i32, %c0_i32_0 : i32, i32
  }
  func.func @transform_3(%arg0: i32) -> (i32, i32) {
    %c0_i32 = arith.constant 0 : i32
    %c0_i32_0 = arith.constant 0 : i32
    %c0_i32_1 = arith.constant 0 : i32
    return %c0_i32, %c0_i32_0 : i32, i32
  }
  func.func @transform_4(%arg0: i32) -> (i32, i32) {
    %c0_i32 = arith.constant 0 : i32
    %c0_i32_0 = arith.constant 0 : i32
    return %arg0, %c0_i32 : i32, i32
  }
}

module attributes {stable_mosaic.version = 11 : i64} {
  func.func @attention_kernel(%arg0: i32, %arg1: memref<2x8x128xf32, #tpu.memory_space<vmem>>, %arg2: memref<128x128xbf16, #tpu.memory_space<vmem>>, %arg3: memref<1x128xf32, #tpu.memory_space<vmem>>, %arg4: memref<1x128xf32, #tpu.memory_space<vmem>>, %arg5: memref<2x128xf32, #tpu.memory_space<vmem>>) attributes {dimension_semantics = [#tpu.dimension_semantics<parallel>], iteration_bounds = array<i64: 1>, scalar_prefetch = 0 : i64, scratch_operands = 0 : i64, tpu.core_type = #tpu.core_type<tc>, window_params = [{transform_indices = @transform_0, window_bounds = array<i64: 2, 8, 128>}, {pipeline_mode = #tpu.pipeline_mode<synchronous>, transform_indices = @transform_1, window_bounds = array<i64: 128, 128>}, {pipeline_mode = #tpu.pipeline_mode<synchronous>, transform_indices = @transform_2, window_bounds = array<i64: 1, 128>}, {pipeline_mode = #tpu.pipeline_mode<synchronous>, transform_indices = @transform_3, window_bounds = array<i64: 1, 128>}, {transform_indices = @transform_4, window_bounds = array<i64: 2, 128>}]} {
    %c0 = arith.constant 0 : index
    %c0_0 = arith.constant 0 : index
    %c0_1 = arith.constant 0 : index
    %0 = vector.load %arg1[%c0, %c0_0, %c0_1] : memref<2x8x128xf32, #tpu.memory_space<vmem>>, vector<2x8x128xf32>
    %1 = vector.shape_cast %0 : vector<2x8x128xf32> to vector<16x128xf32>
    %2 = arith.truncf %1 : vector<16x128xf32> to vector<16x128xbf16>
    %c0_2 = arith.constant 0 : index
    %c0_3 = arith.constant 0 : index
    %3 = vector.load %arg2[%c0_2, %c0_3] : memref<128x128xbf16, #tpu.memory_space<vmem>>, vector<128x128xbf16>
    %cst = arith.constant dense<0.000000e+00> : vector<16x128xf32>
    %4 = tpu.matmul %2, %3, %cst {dimension_numbers = #tpu.dot_dimension_numbers<[1], [0], [0], [1], [0, 0, 1, 1], [], []>} : vector<16x128xbf16>, vector<128x128xbf16>, vector<16x128xf32> -> vector<16x128xf32>
    %c0_4 = arith.constant 0 : index
    %c0_5 = arith.constant 0 : index
    %5 = vector.load %arg3[%c0_4, %c0_5] : memref<1x128xf32, #tpu.memory_space<vmem>>, vector<1x128xf32>
    %6 = vector.broadcast %5 : vector<1x128xf32> to vector<16x128xf32>
    %7 = arith.addf %4, %6 : vector<16x128xf32>
    %8 = math.tanh %7 : vector<16x128xf32>
    %c0_6 = arith.constant 0 : index
    %c0_7 = arith.constant 0 : index
    %9 = vector.load %arg4[%c0_6, %c0_7] : memref<1x128xf32, #tpu.memory_space<vmem>>, vector<1x128xf32>
    %10 = vector.shape_cast %9 : vector<1x128xf32> to vector<1x1x128xf32>
    %11 = vector.shape_cast %8 : vector<16x128xf32> to vector<2x8x128xf32>
    %12 = vector.broadcast %10 : vector<1x1x128xf32> to vector<2x8x128xf32>
    %13 = arith.mulf %11, %12 : vector<2x8x128xf32>
    %cst_8 = arith.constant dense<0.000000e+00> : vector<2x8xf32>
    %14 = vector.multi_reduction <add>, %13, %cst_8 [2] : vector<2x8x128xf32> to vector<2x8xf32>
    %15 = vector.shape_cast %14 : vector<2x8xf32> to vector<2x8x1xf32>
    %cst_9 = arith.constant dense<0xFF800000> : vector<2x1xf32>
    %16 = vector.multi_reduction <maximumf>, %15, %cst_9 [1] : vector<2x8x1xf32> to vector<2x1xf32>
    %17 = vector.shape_cast %16 : vector<2x1xf32> to vector<2x1x1xf32>
    %18 = vector.broadcast %17 : vector<2x1x1xf32> to vector<2x8x1xf32>
    %19 = arith.subf %15, %18 : vector<2x8x1xf32>
    %20 = math.exp %19 : vector<2x8x1xf32>
    %cst_10 = arith.constant dense<0.000000e+00> : vector<2x1xf32>
    %21 = vector.multi_reduction <add>, %20, %cst_10 [1] : vector<2x8x1xf32> to vector<2x1xf32>
    %22 = vector.shape_cast %21 : vector<2x1xf32> to vector<2x1x1xf32>
    %23 = tpu.reciprocal %22 {approx = true} : vector<2x1x1xf32> -> vector<2x1x1xf32>
    %24 = vector.broadcast %23 : vector<2x1x1xf32> to vector<2x8x1xf32>
    %25 = arith.mulf %20, %24 : vector<2x8x1xf32>
    %26 = vector.broadcast %25 : vector<2x8x1xf32> to vector<2x8x128xf32>
    %27 = arith.mulf %26, %0 : vector<2x8x128xf32>
    %cst_11 = arith.constant dense<0.000000e+00> : vector<2x128xf32>
    %28 = vector.multi_reduction <add>, %27, %cst_11 [1] : vector<2x8x128xf32> to vector<2x128xf32>
    %c0_12 = arith.constant 0 : index
    %c0_13 = arith.constant 0 : index
    %29 = vector.load %arg5[%c0_12, %c0_13] : memref<2x128xf32, #tpu.memory_space<vmem>>, vector<2x128xf32>
    tpu.vector_store %arg5[%c0_12, %c0_13], %28 {strides = array<i32>} : memref<2x128xf32, #tpu.memory_space<vmem>>, vector<2x128xf32>,
    return
  }
  func.func @transform_0(%arg0: i32) -> (i32, i32, i32) {
    %c0_i32 = arith.constant 0 : i32
    %c0_i32_0 = arith.constant 0 : i32
    %c0_i32_1 = arith.constant 0 : i32
    return %arg0, %c0_i32, %c0_i32_0 : i32, i32, i32
  }
  func.func @transform_1(%arg0: i32) -> (i32, i32) {
    %c0_i32 = arith.constant 0 : i32
    %c0_i32_0 = arith.constant 0 : i32
    %c0_i32_1 = arith.constant 0 : i32
    return %c0_i32, %c0_i32_0 : i32, i32
  }
  func.func @transform_2(%arg0: i32) -> (i32, i32) {
    %c0_i32 = arith.constant 0 : i32
    %c0_i32_0 = arith.constant 0 : i32
    %c0_i32_1 = arith.constant 0 : i32
    return %c0_i32, %c0_i32_0 : i32, i32
  }
  func.func @transform_3(%arg0: i32) -> (i32, i32) {
    %c0_i32 = arith.constant 0 : i32
    %c0_i32_0 = arith.constant 0 : i32
    %c0_i32_1 = arith.constant 0 : i32
    return %c0_i32, %c0_i32_0 : i32, i32
  }
  func.func @transform_4(%arg0: i32) -> (i32, i32) {
    %c0_i32 = arith.constant 0 : i32
    %c0_i32_0 = arith.constant 0 : i32
    return %arg0, %c0_i32 : i32, i32
  }
}

</mosaic_0001>

<llo_original>
// kernel: tpu_custom_call.1
$region0: #{tpu_custom_call.1}
  #allocation0 [shape = 'u32[]', space=smem, size = 0x4, offset = 0x4, fixed_abs, tag = 'smem constant byte address 0x4 - core index']
  #allocation1 [shape = 'u32[72,128]{1,0:T(1,128)}', space=vmem, size = 0x9000, scoped, tag = 'internal scratch']
  %s0 = inlined_call_operand.hbm [shape: f32[2,8,128], index: 0, kind: input, shape index: {}]
  %s1 = inlined_call_operand.hbm [shape: bf16[128,128], index: 1, kind: input, shape index: {}]
  %s2 = inlined_call_operand.vmem [shape: f32[1,128], index: 2, kind: input, shape index: {}]
  %s3 = inlined_call_operand.vmem [shape: f32[1,128], index: 3, kind: input, shape index: {}]
  %s4 = inlined_call_operand.hbm [shape: f32[2,128], index: 4, kind: output, shape index: {}]
  %s5 = sld [smem:[#allocation0]]
  $region34: #{tpu_custom_call.1} parent=0
    _
  %s7 = ssub.s32 1, %s5
  %s8 = scalar_select 0, %s7, %s5
  $region1: #{tpu_custom_call.1} parent=0
    #allocation2 [shape = 'u8[8192]{0}', space=vmem, size = 0x2000, scoped, tag = 'input window, operand 0, single buffered']
    #allocation3 [shape = 's32[1]{0}', space=sflag, size = 0x4, scoped, tag = 'scoped memory for tpu_custom_call.1']
    #allocation4 [shape = 's32[1]{0}', space=sflag, size = 0x4, scoped, tag = 'scoped memory for tpu_custom_call.1']
    #allocation5 [shape = 'u8[32768]{0}', space=vmem, size = 0x8000, scoped, tag = 'input window, operand 1, single buffered']
    #allocation6 [shape = 's32[1]{0}', space=sflag, size = 0x4, scoped, tag = 'scoped memory for tpu_custom_call.1']
    #allocation7 [shape = 'u8[1024]{0}', space=vmem, size = 0x400, scoped, tag = 'output window, operand 0, single buffered']
    %9 = vsyncpa [#allocation3], 0
    %10 = vsyncpa [#allocation6], 0
    %11 = vsyncpa [#allocation4], 0
    // Predicated region
    $region2: #{tpu_custom_call.1} parent=1 // pred_check
      _
    $region3: #{tpu_custom_call.1} parent=1 // pred_check_branch
      %13 = sbr.rel (0) target = $region5
    $region4: #{tpu_custom_call.1} parent=1 // pred_region
      %15 = vsyncadd [#allocation3], 0
      %s16 = sshll.u32 %s0, 4
      %s17 = int_to_ptr.hbm [resolvable:$true] %s16
      %s18 = sshll.u32 [#allocation2], 4
      %s19 = int_to_ptr.vmem [resolvable:$true] %s18
      %24 = dma.hbm_to_vmem [thread:$0]  %s17, 256, %s19, [#allocation3], 128, 128, 8
    $region5: #{tpu_custom_call.1} parent=1 // pred_fallthru
      _
    // Predicated region
    $region6: #{tpu_custom_call.1} parent=1 // pred_check
      _
    $region7: #{tpu_custom_call.1} parent=1 // pred_check_branch
      %26 = sbr.rel (0) target = $region9
    $region8: #{tpu_custom_call.1} parent=1 // pred_region
      %28 = vsyncadd [#allocation6], 0
      %s29 = sshll.u32 %s1, 4
      %s30 = int_to_ptr.hbm [resolvable:$true] %s29
      %s31 = sshll.u32 [#allocation5], 4
      %s32 = int_to_ptr.vmem [resolvable:$true] %s31
      %37 = dma.hbm_to_vmem [thread:$0]  %s30, 1024, %s32, [#allocation6], 64, 64, 4
    $region9: #{tpu_custom_call.1} parent=1 // pred_fallthru
      _
    // Predicated region
    $region10: #{tpu_custom_call.1} parent=1 // pred_check
      _
    $region11: #{tpu_custom_call.1} parent=1 // pred_check_branch
      %39 = sbr.rel (0) target = $region13
    $region12: #{tpu_custom_call.1} parent=1 // pred_region
      _
    $region13: #{tpu_custom_call.1} parent=1 // pred_fallthru
      _
    // Predicated region
    $region14: #{tpu_custom_call.1} parent=1 // pred_check
      _
    $region15: #{tpu_custom_call.1} parent=1 // pred_check_branch
      %41 = sbr.rel (0) target = $region17
    $region16: #{tpu_custom_call.1} parent=1 // pred_region
      _
    $region17: #{tpu_custom_call.1} parent=1 // pred_fallthru
      _
    // Predicated region
    $region18: #{tpu_custom_call.1} parent=1 // pred_check
      _
    $region19: #{tpu_custom_call.1} parent=1 // pred_check_branch
      %43 = sbr.rel (0) target = $region21
    $region20: #{tpu_custom_call.1} parent=1 // pred_region
      %45 = dma.done [#allocation3], 256
    $region21: #{tpu_custom_call.1} parent=1 // pred_fallthru
      _
    // Predicated region
    $region22: #{tpu_custom_call.1} parent=1 // pred_check
      _
    $region23: #{tpu_custom_call.1} parent=1 // pred_check_branch
      %47 = sbr.rel (0) target = $region25
    $region24: #{tpu_custom_call.1} parent=1 // pred_region
      %49 = dma.done [#allocation6], 1024
    $region25: #{tpu_custom_call.1} parent=1 // pred_fallthru
      _
    %v50 = vld [vmem:[#allocation2] sm:$0xff]
    %v51 = vld [vmem:[#allocation2 + $0x8] sm:$0xff]
    %v52 = vpack.c.bf16 %v51, %v50
    %v53 = vld [vmem:[#allocation5] sm:$0xf]
    %v54 = vld [vmem:[#allocation5 + $0x4] sm:$0xf]
    %v55 = vld [vmem:[#allocation5 + $0x8] sm:$0xf]
    %v56 = vld [vmem:[#allocation5 + $0xc] sm:$0xf]
    %v57 = vld [vmem:[#allocation5 + $0x10] sm:$0xf]
    %v58 = vld [vmem:[#allocation5 + $0x14] sm:$0xf]
    %v59 = vld [vmem:[#allocation5 + $0x18] sm:$0xf]
    %v60 = vld [vmem:[#allocation5 + $0x1c] sm:$0xf]
    %v61 = vld [vmem:[#allocation5 + $0x20] sm:$0xf]
    %v62 = vld [vmem:[#allocation5 + $0x24] sm:$0xf]
    %v63 = vld [vmem:[#allocation5 + $0x28] sm:$0xf]
    %v64 = vld [vmem:[#allocation5 + $0x2c] sm:$0xf]
    %v65 = vld [vmem:[#allocation5 + $0x30] sm:$0xf]
    %v66 = vld [vmem:[#allocation5 + $0x34] sm:$0xf]
    %v67 = vld [vmem:[#allocation5 + $0x38] sm:$0xf]
    %v68 = vld [vmem:[#allocation5 + $0x3c] sm:$0xf]
    %v69 = vld [vmem:[%s2] sm:$0x1]
    %v71 = vperm.slane %v69, 0
    %v89 = vunpack.c.l.b16 %v53
    %v90 = vunpack.c.l.b16 %v54
    %v91 = vunpack.c.l.b16 %v55
    %v92 = vunpack.c.l.b16 %v56
    %v93 = vunpack.c.l.b16 %v57
    %v94 = vunpack.c.l.b16 %v58
    %v95 = vunpack.c.l.b16 %v59
    %v96 = vunpack.c.l.b16 %v60
    %v97 = vunpack.c.l.b16 %v61
    %v98 = vunpack.c.l.b16 %v62
    %v99 = vunpack.c.l.b16 %v63
    %v100 = vunpack.c.l.b16 %v64
    %v101 = vunpack.c.l.b16 %v65
    %v102 = vunpack.c.l.b16 %v66
    %v103 = vunpack.c.l.b16 %v67
    %v104 = vunpack.c.l.b16 %v68
    %v105 = vpack.c.b16 %v90, %v89
    %v106 = vpack.c.b16 %v92, %v91
    %v107 = vpack.c.b16 %v94, %v93
    %v108 = vpack.c.b16 %v96, %v95
    %v109 = vpack.c.b16 %v98, %v97
    %v110 = vpack.c.b16 %v100, %v99
    %v111 = vpack.c.b16 %v102, %v101
    %v112 = vpack.c.b16 %v104, %v103
    %121 = vmatpush.bf16.msra.mxu0 %v112
    %122 = vmatpush.bf16.msra.mxu0 %v111
    %123 = vmatpush.bf16.msra.mxu0 %v110
    %124 = vmatpush.bf16.msra.mxu0 %v109
    %125 = vmatpush.bf16.msra.mxu0 %v108
    %126 = vmatpush.bf16.msra.mxu0 %v107
    %127 = vmatpush.bf16.msra.mxu0 %v106
    %128 = vmatpush.bf16.msra.mxu0 %v105
    %129 = vmatmul.bf16.gmra.mxu0 %v52
    %v130 = vpop.f32.mrf.mxu0
    %v131 = vadd.f32 %v71, %v130
    %v132 = vpop.f32.mrf.mxu0
    %v133 = vadd.f32 %v71, %v132
    %134 = vdwg.mxu0
    %v135 = vtanh.pop %v131
    %v136 = vtanh.pop %v133
    %v137 = vld [vmem:[%s3] sm:$0x1]
    %v139 = vperm.slane %v137, 0
    %v141 = vmul.f32 %v135, %v139
    %v142 = vmul.f32 %v136, %v139
    %143 = vadd.xlane.f32.xlu0 %v141
    %v144 = vpop.xlane.xlu0 %143
    %145 = vadd.xlane.f32.xlu0 %v142
    %v146 = vpop.xlane.xlu0 %145
    %v147 = vrot.slane %v144, 4
    %v148 = vmax.f32 %v144, %v147
    %v149 = vrot.slane %v148, 2
    %v150 = vmax.f32 %v148, %v149
    %v151 = vrot.slane %v150, 1
    %v152 = vmax.f32 %v150, %v151
    %v153 = vrot.slane %v146, 4
    %v154 = vmax.f32 %v146, %v153
    %v155 = vrot.slane %v154, 2
    %v156 = vmax.f32 %v154, %v155
    %v157 = vrot.slane %v156, 1
    %v158 = vmax.f32 %v156, %v157
    %v159 = vsub.f32 %v144, %v152
    %v160 = vsub.f32 %v146, %v158
    %v161 = vmul.f32 %v159, 1.442695
    %v162 = vpow.pop %v161
    %v163 = vmul.f32 %v160, 1.442695
    %v164 = vpow.pop %v163
    %v165 = vrot.slane %v162, 4
    %v166 = vadd.f32 %v162, %v165
    %v167 = vrot.slane %v166, 2
    %v168 = vadd.f32 %v166, %v167
    %v169 = vrot.slane %v168, 1
    %v170 = vadd.f32 %v168, %v169
    %v171 = vrot.slane %v164, 4
    %v172 = vadd.f32 %v164, %v171
    %v173 = vrot.slane %v172, 2
    %v174 = vadd.f32 %v172, %v173
    %v175 = vrot.slane %v174, 1
    %v176 = vadd.f32 %v174, %v175
    %v177 = vrcp.pop %v170
    %v178 = vrcp.pop %v176
    %v179 = vmul.f32 %v162, %v177
    %v180 = vmul.f32 %v164, %v178
    %v181 = vmul.f32 %v179, %v50
    %v182 = vmul.f32 %v180, %v51
    %v183 = vrot.slane %v181, 4
    %v184 = vadd.f32 %v181, %v183
    %v185 = vrot.slane %v184, 2
    %v186 = vadd.f32 %v184, %v185
    %v187 = vrot.slane %v186, 1
    %v188 = vadd.f32 %v186, %v187
    %v189 = vrot.slane %v182, 4
    %v190 = vadd.f32 %v182, %v189
    %v191 = vrot.slane %v190, 2
    %v192 = vadd.f32 %v190, %v191
    %v193 = vrot.slane %v192, 1
    %v194 = vadd.f32 %v192, %v193
    %vm197 = vcmask 1041409
    %v198 = vsel %vm197, %v194, %v188
    %200 = vst [vmem:[#allocation7] sm:$0x3] %v198
    // Predicated region
    $region26: #{tpu_custom_call.1} parent=1 // pred_check
      _
    $region27: #{tpu_custom_call.1} parent=1 // pred_check_branch
      %202 = sbr.rel (0) target = $region29
    $region28: #{tpu_custom_call.1} parent=1 // pred_region
      %204 = vsyncadd [#allocation4], 0
      %s206 = sshll.u32 [#allocation7], 4
      %s207 = int_to_ptr.vmem [resolvable:$true] %s206
      %s208 = sshll.u32 %s4, 4
      %s209 = int_to_ptr.hbm [resolvable:$true] %s208
      %211 = dma.vmem_to_hbm [thread:$0]  %s207, 32, %s209, [#allocation4]
    $region29: #{tpu_custom_call.1} parent=1 // pred_fallthru
      _
    // Predicated region
    $region30: #{tpu_custom_call.1} parent=1 // pred_check
      _
    $region31: #{tpu_custom_call.1} parent=1 // pred_check_branch
      %213 = sbr.rel (0) target = $region33
    $region32: #{tpu_custom_call.1} parent=1 // pred_region
      %215 = dma.done [#allocation4], 32
    $region33: #{tpu_custom_call.1} parent=1 // pred_fallthru
      _
    %216 = vsyncpa [#allocation3], 1
    %217 = vsyncpa [#allocation6], 1
    %218 = vsyncpa [#allocation4], 1

// kernel: tpu_custom_call.1
$region0: #{tpu_custom_call.1}
  #allocation0 [shape = 'u32[]', space=smem, size = 0x4, offset = 0x4, fixed_abs, tag = 'smem constant byte address 0x4 - core index']
  #allocation1 [shape = 'u32[72,128]{1,0:T(1,128)}', space=vmem, size = 0x9000, scoped, tag = 'internal scratch']
  %s0 = inlined_call_operand.hbm [shape: f32[2,8,128], index: 0, kind: input, shape index: {}]
  %s1 = inlined_call_operand.hbm [shape: bf16[128,128], index: 1, kind: input, shape index: {}]
  %s2 = inlined_call_operand.vmem [shape: f32[1,128], index: 2, kind: input, shape index: {}]
  %s3 = inlined_call_operand.vmem [shape: f32[1,128], index: 3, kind: input, shape index: {}]
  %s4 = inlined_call_operand.hbm [shape: f32[2,128], index: 4, kind: output, shape index: {}]
  %s5 = sld [smem:[#allocation0]]
  $region34: #{tpu_custom_call.1} parent=0
    _
  %s7 = ssub.s32 1, %s5
  %s8 = scalar_select 0, %s7, %s5
  $region1: #{tpu_custom_call.1} parent=0
    #allocation2 [shape = 'u8[8192]{0}', space=vmem, size = 0x2000, scoped, tag = 'input window, operand 0, single buffered']
    #allocation3 [shape = 's32[1]{0}', space=sflag, size = 0x4, scoped, tag = 'scoped memory for tpu_custom_call.1']
    #allocation4 [shape = 's32[1]{0}', space=sflag, size = 0x4, scoped, tag = 'scoped memory for tpu_custom_call.1']
    #allocation5 [shape = 'u8[32768]{0}', space=vmem, size = 0x8000, scoped, tag = 'input window, operand 1, single buffered']
    #allocation6 [shape = 's32[1]{0}', space=sflag, size = 0x4, scoped, tag = 'scoped memory for tpu_custom_call.1']
    #allocation7 [shape = 'u8[1024]{0}', space=vmem, size = 0x400, scoped, tag = 'output window, operand 0, single buffered']
    %9 = vsyncpa [#allocation3], 0
    %10 = vsyncpa [#allocation6], 0
    %11 = vsyncpa [#allocation4], 0
    // Predicated region
    $region2: #{tpu_custom_call.1} parent=1 // pred_check
      _
    $region3: #{tpu_custom_call.1} parent=1 // pred_check_branch
      %13 = sbr.rel (0) target = $region5
    $region4: #{tpu_custom_call.1} parent=1 // pred_region
      %15 = vsyncadd [#allocation3], 0
      %s16 = sshll.u32 %s0, 4
      %s17 = int_to_ptr.hbm [resolvable:$true] %s16
      %s18 = sshll.u32 [#allocation2], 4
      %s19 = int_to_ptr.vmem [resolvable:$true] %s18
      %24 = dma.hbm_to_vmem [thread:$0]  %s17, 256, %s19, [#allocation3], 128, 128, 8
    $region5: #{tpu_custom_call.1} parent=1 // pred_fallthru
      _
    // Predicated region
    $region6: #{tpu_custom_call.1} parent=1 // pred_check
      _
    $region7: #{tpu_custom_call.1} parent=1 // pred_check_branch
      %26 = sbr.rel (0) target = $region9
    $region8: #{tpu_custom_call.1} parent=1 // pred_region
      %28 = vsyncadd [#allocation6], 0
      %s29 = sshll.u32 %s1, 4
      %s30 = int_to_ptr.hbm [resolvable:$true] %s29
      %s31 = sshll.u32 [#allocation5], 4
      %s32 = int_to_ptr.vmem [resolvable:$true] %s31
      %37 = dma.hbm_to_vmem [thread:$0]  %s30, 1024, %s32, [#allocation6], 64, 64, 4
    $region9: #{tpu_custom_call.1} parent=1 // pred_fallthru
      _
    // Predicated region
    $region10: #{tpu_custom_call.1} parent=1 // pred_check
      _
    $region11: #{tpu_custom_call.1} parent=1 // pred_check_branch
      %39 = sbr.rel (0) target = $region13
    $region12: #{tpu_custom_call.1} parent=1 // pred_region
      _
    $region13: #{tpu_custom_call.1} parent=1 // pred_fallthru
      _
    // Predicated region
    $region14: #{tpu_custom_call.1} parent=1 // pred_check
      _
    $region15: #{tpu_custom_call.1} parent=1 // pred_check_branch
      %41 = sbr.rel (0) target = $region17
    $region16: #{tpu_custom_call.1} parent=1 // pred_region
      _
    $region17: #{tpu_custom_call.1} parent=1 // pred_fallthru
      _
    // Predicated region
    $region18: #{tpu_custom_call.1} parent=1 // pred_check
      _
    $region19: #{tpu_custom_call.1} parent=1 // pred_check_branch
      %43 = sbr.rel (0) target = $region21
    $region20: #{tpu_custom_call.1} parent=1 // pred_region
      %45 = dma.done [#allocation3], 256
    $region21: #{tpu_custom_call.1} parent=1 // pred_fallthru
      _
    // Predicated region
    $region22: #{tpu_custom_call.1} parent=1 // pred_check
      _
    $region23: #{tpu_custom_call.1} parent=1 // pred_check_branch
      %47 = sbr.rel (0) target = $region25
    $region24: #{tpu_custom_call.1} parent=1 // pred_region
      %49 = dma.done [#allocation6], 1024
    $region25: #{tpu_custom_call.1} parent=1 // pred_fallthru
      _
    %v50 = vld [vmem:[#allocation2] sm:$0xff]
    %v51 = vld [vmem:[#allocation2 + $0x8] sm:$0xff]
    %v52 = vpack.c.bf16 %v51, %v50
    %v53 = vld [vmem:[#allocation5] sm:$0xf]
    %v54 = vld [vmem:[#allocation5 + $0x4] sm:$0xf]
    %v55 = vld [vmem:[#allocation5 + $0x8] sm:$0xf]
    %v56 = vld [vmem:[#allocation5 + $0xc] sm:$0xf]
    %v57 = vld [vmem:[#allocation5 + $0x10] sm:$0xf]
    %v58 = vld [vmem:[#allocation5 + $0x14] sm:$0xf]
    %v59 = vld [vmem:[#allocation5 + $0x18] sm:$0xf]
    %v60 = vld [vmem:[#allocation5 + $0x1c] sm:$0xf]
    %v61 = vld [vmem:[#allocation5 + $0x20] sm:$0xf]
    %v62 = vld [vmem:[#allocation5 + $0x24] sm:$0xf]
    %v63 = vld [vmem:[#allocation5 + $0x28] sm:$0xf]
    %v64 = vld [vmem:[#allocation5 + $0x2c] sm:$0xf]
    %v65 = vld [vmem:[#allocation5 + $0x30] sm:$0xf]
    %v66 = vld [vmem:[#allocation5 + $0x34] sm:$0xf]
    %v67 = vld [vmem:[#allocation5 + $0x38] sm:$0xf]
    %v68 = vld [vmem:[#allocation5 + $0x3c] sm:$0xf]
    %v69 = vld [vmem:[%s2] sm:$0x1]
    %v71 = vperm.slane %v69, 0
    %v89 = vunpack.c.l.b16 %v53
    %v90 = vunpack.c.l.b16 %v54
    %v91 = vunpack.c.l.b16 %v55
    %v92 = vunpack.c.l.b16 %v56
    %v93 = vunpack.c.l.b16 %v57
    %v94 = vunpack.c.l.b16 %v58
    %v95 = vunpack.c.l.b16 %v59
    %v96 = vunpack.c.l.b16 %v60
    %v97 = vunpack.c.l.b16 %v61
    %v98 = vunpack.c.l.b16 %v62
    %v99 = vunpack.c.l.b16 %v63
    %v100 = vunpack.c.l.b16 %v64
    %v101 = vunpack.c.l.b16 %v65
    %v102 = vunpack.c.l.b16 %v66
    %v103 = vunpack.c.l.b16 %v67
    %v104 = vunpack.c.l.b16 %v68
    %v105 = vpack.c.b16 %v90, %v89
    %v106 = vpack.c.b16 %v92, %v91
    %v107 = vpack.c.b16 %v94, %v93
    %v108 = vpack.c.b16 %v96, %v95
    %v109 = vpack.c.b16 %v98, %v97
    %v110 = vpack.c.b16 %v100, %v99
    %v111 = vpack.c.b16 %v102, %v101
    %v112 = vpack.c.b16 %v104, %v103
    %121 = vmatpush.bf16.msra.mxu0 %v112
    %122 = vmatpush.bf16.msra.mxu0 %v111
    %123 = vmatpush.bf16.msra.mxu0 %v110
    %124 = vmatpush.bf16.msra.mxu0 %v109
    %125 = vmatpush.bf16.msra.mxu0 %v108
    %126 = vmatpush.bf16.msra.mxu0 %v107
    %127 = vmatpush.bf16.msra.mxu0 %v106
    %128 = vmatpush.bf16.msra.mxu0 %v105
    %129 = vmatmul.bf16.gmra.mxu0 %v52
    %v130 = vpop.f32.mrf.mxu0
    %v131 = vadd.f32 %v71, %v130
    %v132 = vpop.f32.mrf.mxu0
    %v133 = vadd.f32 %v71, %v132
    %134 = vdwg.mxu0
    %v135 = vtanh.pop %v131
    %v136 = vtanh.pop %v133
    %v137 = vld [vmem:[%s3] sm:$0x1]
    %v139 = vperm.slane %v137, 0
    %v141 = vmul.f32 %v135, %v139
    %v142 = vmul.f32 %v136, %v139
    %143 = vadd.xlane.f32.xlu0 %v141
    %v144 = vpop.xlane.xlu0 %143
    %145 = vadd.xlane.f32.xlu0 %v142
    %v146 = vpop.xlane.xlu0 %145
    %v147 = vrot.slane %v144, 4
    %v148 = vmax.f32 %v144, %v147
    %v149 = vrot.slane %v148, 2
    %v150 = vmax.f32 %v148, %v149
    %v151 = vrot.slane %v150, 1
    %v152 = vmax.f32 %v150, %v151
    %v153 = vrot.slane %v146, 4
    %v154 = vmax.f32 %v146, %v153
    %v155 = vrot.slane %v154, 2
    %v156 = vmax.f32 %v154, %v155
    %v157 = vrot.slane %v156, 1
    %v158 = vmax.f32 %v156, %v157
    %v159 = vsub.f32 %v144, %v152
    %v160 = vsub.f32 %v146, %v158
    %v161 = vmul.f32 %v159, 1.442695
    %v162 = vpow.pop %v161
    %v163 = vmul.f32 %v160, 1.442695
    %v164 = vpow.pop %v163
    %v165 = vrot.slane %v162, 4
    %v166 = vadd.f32 %v162, %v165
    %v167 = vrot.slane %v166, 2
    %v168 = vadd.f32 %v166, %v167
    %v169 = vrot.slane %v168, 1
    %v170 = vadd.f32 %v168, %v169
    %v171 = vrot.slane %v164, 4
    %v172 = vadd.f32 %v164, %v171
    %v173 = vrot.slane %v172, 2
    %v174 = vadd.f32 %v172, %v173
    %v175 = vrot.slane %v174, 1
    %v176 = vadd.f32 %v174, %v175
    %v177 = vrcp.pop %v170
    %v178 = vrcp.pop %v176
    %v179 = vmul.f32 %v162, %v177
    %v180 = vmul.f32 %v164, %v178
    %v181 = vmul.f32 %v179, %v50
    %v182 = vmul.f32 %v180, %v51
    %v183 = vrot.slane %v181, 4
    %v184 = vadd.f32 %v181, %v183
    %v185 = vrot.slane %v184, 2
    %v186 = vadd.f32 %v184, %v185
    %v187 = vrot.slane %v186, 1
    %v188 = vadd.f32 %v186, %v187
    %v189 = vrot.slane %v182, 4
    %v190 = vadd.f32 %v182, %v189
    %v191 = vrot.slane %v190, 2
    %v192 = vadd.f32 %v190, %v191
    %v193 = vrot.slane %v192, 1
    %v194 = vadd.f32 %v192, %v193
    %vm197 = vcmask 1041409
    %v198 = vsel %vm197, %v194, %v188
    %200 = vst [vmem:[#allocation7] sm:$0x3] %v198
    // Predicated region
    $region26: #{tpu_custom_call.1} parent=1 // pred_check
      _
    $region27: #{tpu_custom_call.1} parent=1 // pred_check_branch
      %202 = sbr.rel (0) target = $region29
    $region28: #{tpu_custom_call.1} parent=1 // pred_region
      %204 = vsyncadd [#allocation4], 0
      %s206 = sshll.u32 [#allocation7], 4
      %s207 = int_to_ptr.vmem [resolvable:$true] %s206
      %s208 = sshll.u32 %s4, 4
      %s209 = int_to_ptr.hbm [resolvable:$true] %s208
      %211 = dma.vmem_to_hbm [thread:$0]  %s207, 32, %s209, [#allocation4]
    $region29: #{tpu_custom_call.1} parent=1 // pred_fallthru
      _
    // Predicated region
    $region30: #{tpu_custom_call.1} parent=1 // pred_check
      _
    $region31: #{tpu_custom_call.1} parent=1 // pred_check_branch
      %213 = sbr.rel (0) target = $region33
    $region32: #{tpu_custom_call.1} parent=1 // pred_region
      %215 = dma.done [#allocation4], 32
    $region33: #{tpu_custom_call.1} parent=1 // pred_fallthru
      _
    %216 = vsyncpa [#allocation3], 1
    %217 = vsyncpa [#allocation6], 1
    %218 = vsyncpa [#allocation4], 1

</llo_original>
